<compile_context>
chip_gen: v7x
topology: tpu7x:2x2x1
jax: 0.10.0
libtpu: 0.0.40
codegen_flags: <defaults>
</compile_context>

<pallas_src>
import functools

import jax
import jax.numpy as jnp
from jax.experimental import pallas as pl
from jax.experimental.pallas import tpu as pltpu


def _pow2_tile(n, cap):
    """Largest power-of-two tile needed for n, capped at pow2(cap)."""
    c = 1
    while c * 2 <= cap:
        c *= 2
    t = 1
    while t < n and t < c:
        t *= 2
    return t


def _vmem_limit_bytes():
    """Per-generation VMEM budget (v7x has 64 MiB/TC vs 128 MiB on v5e/v6e)."""
    try:
        cap = pltpu.get_tpu_info().vmem_capacity_bytes
        return min(int(cap * 3 // 4), 100 * 1024 * 1024)
    except Exception:
        return 48 * 1024 * 1024


# ---------------------------------------------------------------------------
# Kernel 1: QKV projection (scale folded into Q columns) + head split.
# ---------------------------------------------------------------------------
def _qkv_head_split_kernel(x_ref, w_ref, q_ref, k_ref, v_ref, *,
                           num_heads, head_dim):
    # x_ref: (1, tr, C) bf16; w_ref: (C, 3C) bf16 (grid-invariant, fetched once)
    y = jnp.dot(x_ref[0], w_ref[...], preferred_element_type=jnp.float32)
    y = y.astype(q_ref.dtype)                                   # (tr, 3C) bf16
    C = num_heads * head_dim
    for h in range(num_heads):                                  # static unroll
        lo = h * head_dim
        q_ref[0, h] = y[:, lo:lo + head_dim]
        k_ref[0, h] = y[:, C + lo:C + lo + head_dim]
        v_ref[0, h] = y[:, 2 * C + lo:2 * C + lo + head_dim]


# ---------------------------------------------------------------------------
# Kernel 2: per-head flash attention + fused head-merge output projection.
# ---------------------------------------------------------------------------
def _flash_head_proj_kernel(q_ref, k_ref, v_ref, wp_ref, bp_ref, o_ref,
                            m_scr, l_scr, acc_scr, out_scr,
                            *, kv_tile, n_valid, mask_kv):
    h = pl.program_id(2)
    ki = pl.program_id(3)
    nh = pl.num_programs(2)
    nk = pl.num_programs(3)

    @pl.when(ki == 0)
    def _init():
        m_scr[...] = jnp.full_like(m_scr, -jnp.inf)
        l_scr[...] = jnp.zeros_like(l_scr)
        acc_scr[...] = jnp.zeros_like(acc_scr)

    q = q_ref[0, 0]                                   # (tq, hd) bf16 (pre-scaled)
    k = k_ref[0, 0]                                   # (tk, hd) bf16
    v = v_ref[0, 0]                                   # (tk, hd) bf16

    # Scores: contract the last dims directly (no explicit K transpose).
    s = jax.lax.dot_general(q, k, (((1,), (1,)), ((), ())),
                            preferred_element_type=jnp.float32)  # (tq, tk) f32
    if mask_kv:
        col = jax.lax.broadcasted_iota(jnp.int32, s.shape, 1)
        s = jnp.where(ki * kv_tile + col < n_valid, s, jnp.float32(-1e30))

    m_prev = m_scr[...]                                           # (tq, 1)
    m_new = jnp.maximum(m_prev, jnp.max(s, axis=-1, keepdims=True))
    alpha = jnp.exp(m_prev - m_new)                               # (tq, 1)
    p = jnp.exp(s - m_new)                                        # (tq, tk) f32

    l_scr[...] = alpha * l_scr[...] + jnp.sum(p, axis=-1, keepdims=True)
    acc_scr[...] = alpha * acc_scr[...] + jnp.dot(
        p.astype(v.dtype), v, preferred_element_type=jnp.float32)  # (tq, hd)
    m_scr[...] = m_new

    @pl.when(ki == nk - 1)
    def _finalize():
        inv_l = pl.reciprocal(l_scr[...], approx=True)            # EUP path
        attn = (acc_scr[...] * inv_l).astype(wp_ref.dtype)        # (tq, hd) bf16
        # This head's slice of W_proj: dynamic index on the major axis of the
        # VMEM-resident (H, hd, C) weight -> (hd, C); project to a lane-dense
        # (tq, C) contribution and accumulate into the resident output slab.
        contrib = jnp.dot(attn, wp_ref[h],
                          preferred_element_type=jnp.float32)     # (tq, C) f32

        @pl.when(h == 0)
        def _():
            out_scr[...] = contrib

        @pl.when(h > 0)
        def _():
            out_scr[...] = out_scr[...] + contrib

        @pl.when(h == nh - 1)
        def _():
            o_ref[0] = (out_scr[...] + bp_ref[...]).astype(o_ref.dtype)


# ---------------------------------------------------------------------------
# Wrapper
# ---------------------------------------------------------------------------
def attention_pallas(x, w_qkv, w_proj, b_proj, *, num_heads,
                     row_tile=256, q_tile=256, kv_tile=512):
    """x: (B, N, C); w_qkv: (3C, C) torch layout; w_proj: (C, C) torch layout;
    b_proj: (C,). Returns (B, N, C)."""
    B, N, C = x.shape
    assert C % num_heads == 0
    hd = C // num_heads
    scale = hd ** -0.5

    # Tile choice + padding (all tiles are powers of two -> each divides N_pad).
    tr = _pow2_tile(N, row_tile)
    tq = _pow2_tile(N, q_tile)
    tk = _pow2_tile(N, kv_tile)
    t_max = max(tr, tq, tk)
    n_pad = ((N + t_max - 1) // t_max) * t_max

    # ---- trace-time weight prep (constant transforms, bf16 MXU operands) ----
    w_qkv_t = jnp.asarray(w_qkv, jnp.float32).T                     # (C, 3C)
    col_scale = jnp.concatenate(
        [jnp.full((C,), scale, jnp.float32), jnp.ones((2 * C,), jnp.float32)])
    w_qkv_t = (w_qkv_t * col_scale[None, :]).astype(jnp.bfloat16)   # scale -> Q
    w_proj_h = jnp.asarray(w_proj, jnp.float32).T.reshape(
        num_heads, hd, C).astype(jnp.bfloat16)                      # (H, hd, C)
    b_proj_2d = jnp.asarray(b_proj, jnp.float32).reshape(1, C)

    x_bf = x.astype(jnp.bfloat16)
    if n_pad != N:
        x_bf = jnp.pad(x_bf, ((0, 0), (0, n_pad - N), (0, 0)))

    vmem_limit = _vmem_limit_bytes()

    # ---- kernel 1: QKV projection + head split ----
    qkv_out_shape = tuple(
        jax.ShapeDtypeStruct((B, num_heads, n_pad, hd), jnp.bfloat16)
        for _ in range(3))
    q, k, v = pl.pallas_call(
        functools.partial(_qkv_head_split_kernel,
                          num_heads=num_heads, head_dim=hd),
        out_shape=qkv_out_shape,
        grid_spec=pltpu.PrefetchScalarGridSpec(
            num_scalar_prefetch=0,
            grid=(B, n_pad // tr),
            in_specs=[
                pl.BlockSpec((1, tr, C), lambda b, r: (b, r, 0)),
                # Grid-invariant block index -> weight fetched once.
                pl.BlockSpec((C, 3 * C), lambda b, r: (0, 0)),
            ],
            out_specs=[
                pl.BlockSpec((1, num_heads, tr, hd), lambda b, r: (b, 0, r, 0)),
                pl.BlockSpec((1, num_heads, tr, hd), lambda b, r: (b, 0, r, 0)),
                pl.BlockSpec((1, num_heads, tr, hd), lambda b, r: (b, 0, r, 0)),
            ],
        ),
        compiler_params=pltpu.CompilerParams(
            dimension_semantics=("parallel", "parallel"),
            vmem_limit_bytes=vmem_limit),
    )(x_bf, w_qkv_t)

    # ---- kernel 2: per-head flash attention + output projection ----
    n_q = n_pad // tq
    n_k = n_pad // tk
    out = pl.pallas_call(
        functools.partial(_flash_head_proj_kernel,
                          kv_tile=tk, n_valid=N, mask_kv=(n_pad != N)),
        out_shape=jax.ShapeDtypeStruct((B, n_pad, C), x.dtype),
        grid_spec=pltpu.PrefetchScalarGridSpec(
            num_scalar_prefetch=0,
            grid=(B, n_q, num_heads, n_k),
            in_specs=[
                pl.BlockSpec((1, 1, tq, hd), lambda b, qi, h, ki: (b, h, qi, 0)),
                pl.BlockSpec((1, 1, tk, hd), lambda b, qi, h, ki: (b, h, ki, 0)),
                pl.BlockSpec((1, 1, tk, hd), lambda b, qi, h, ki: (b, h, ki, 0)),
                # Whole W_proj kept VMEM-resident (grid-invariant index).
                pl.BlockSpec((num_heads, hd, C), lambda b, qi, h, ki: (0, 0, 0)),
                pl.BlockSpec((1, C), lambda b, qi, h, ki: (0, 0)),
            ],
            out_specs=pl.BlockSpec((1, tq, C), lambda b, qi, h, ki: (b, qi, 0)),
            scratch_shapes=[
                pltpu.VMEM((tq, 1), jnp.float32),    # running max (per head)
                pltpu.VMEM((tq, 1), jnp.float32),    # running sum (per head)
                pltpu.VMEM((tq, hd), jnp.float32),   # per-head output accum
                pltpu.VMEM((tq, C), jnp.float32),    # projected output slab
            ],
        ),
        compiler_params=pltpu.CompilerParams(
            dimension_semantics=("parallel", "parallel", "arbitrary", "arbitrary"),
            vmem_limit_bytes=vmem_limit),
    )(q, k, v, w_proj_h, b_proj_2d)

    if n_pad != N:
        out = out[:, :N, :]
    return out


def attention_reference(x, w_qkv, w_proj, b_proj, *, num_heads):
    """Pure-JAX f32 reference mirroring the PyTorch forward exactly."""
    B, N, C = x.shape
    hd = C // num_heads
    scale = hd ** -0.5
    qkv = jnp.einsum('bnc,oc->bno', x, w_qkv)                 # (B, N, 3C)
    qkv = qkv.reshape(B, N, 3, num_heads, hd).transpose(2, 0, 3, 1, 4)
    q, k, v = qkv[0] * scale, qkv[1], qkv[2]                  # (B, H, N, hd)
    attn = jnp.einsum('bhnd,bhmd->bhnm', q, k)
    attn = jax.nn.softmax(attn, axis=-1)
    out = jnp.einsum('bhnm,bhmd->bhnd', attn, v)              # (B, H, N, hd)
    out = out.transpose(0, 2, 1, 3).reshape(B, N, C)
    return jnp.einsum('bnc,oc->bno', out, w_proj) + b_proj


if __name__ == "__main__":
    # Small shapes consistent with the module: dim=32, num_heads=8.
    B, N, C = 2, 16, 32
    num_heads = 8

    key = jax.random.PRNGKey(0)
    kx, kqkv, kproj, kb = jax.random.split(key, 4)

    x = jax.random.normal(kx, (B, N, C), dtype=jnp.float32)
    # torch nn.Linear weight layout: (out_features, in_features)
    w_qkv = jax.random.normal(kqkv, (3 * C, C), dtype=jnp.float32) * 0.05
    w_proj = jax.random.normal(kproj, (C, C), dtype=jnp.float32) * 0.05
    b_proj = jax.random.normal(kb, (C,), dtype=jnp.float32) * 0.05

    # 1) Multi-tile path: small tiles give grid (B, 2, H, 2), exercising the
    #    online-softmax recurrence and cross-head output accumulation.
    out = attention_pallas(x, w_qkv, w_proj, b_proj, num_heads=num_heads,
                           row_tile=8, q_tile=8, kv_tile=8)
    out = jax.block_until_ready(out)
    ref = attention_reference(x, w_qkv, w_proj, b_proj, num_heads=num_heads)
    assert out.shape == (B, N, C)
    err = jnp.max(jnp.abs(out - ref))
    assert jnp.allclose(out, ref, atol=2e-2, rtol=2e-2), f"max abs err {err}"

    # 2) Ragged path: N=13 pads to 16 and exercises kv masking + output slice.
    x13 = x[:, :13, :]
    out13 = attention_pallas(x13, w_qkv, w_proj, b_proj, num_heads=num_heads)
    out13 = jax.block_until_ready(out13)
    ref13 = attention_reference(x13, w_qkv, w_proj, b_proj, num_heads=num_heads)
    assert out13.shape == (B, 13, C)
    err13 = jnp.max(jnp.abs(out13 - ref13))
    assert jnp.allclose(out13, ref13, atol=2e-2, rtol=2e-2), f"max abs err {err13}"

    print("KERNEL_OK")
</pallas_src>

<mosaic_0001>
module attributes {stable_mosaic.version = 11 : i64} {
  func.func @_qkv_head_split_kernel(%arg0: i32, %arg1: i32, %arg2: memref<1x8x32xbf16, #tpu.memory_space<vmem>>, %arg3: memref<32x96xbf16, #tpu.memory_space<vmem>>, %arg4: memref<1x8x8x4xbf16, #tpu.memory_space<vmem>>, %arg5: memref<1x8x8x4xbf16, #tpu.memory_space<vmem>>, %arg6: memref<1x8x8x4xbf16, #tpu.memory_space<vmem>>) attributes {dimension_semantics = [#tpu.dimension_semantics<parallel>, #tpu.dimension_semantics<parallel>], iteration_bounds = array<i64: 2, 2>, scalar_prefetch = 0 : i64, scratch_operands = 0 : i64, tpu.core_type = #tpu.core_type<tc>, window_params = [{transform_indices = @transform_0, window_bounds = array<i64: 1, 8, 32>}, {pipeline_mode = #tpu.pipeline_mode<synchronous>, transform_indices = @transform_1, window_bounds = array<i64: 32, 96>}, {transform_indices = @transform_2, window_bounds = array<i64: 1, 8, 8, 4>}, {transform_indices = @transform_3, window_bounds = array<i64: 1, 8, 8, 4>}, {transform_indices = @transform_4, window_bounds = array<i64: 1, 8, 8, 4>}]} {
    %c0 = arith.constant 0 : index
    %c0_0 = arith.constant 0 : index
    %c0_1 = arith.constant 0 : index
    %0 = vector.load %arg2[%c0, %c0_0, %c0_1] : memref<1x8x32xbf16, #tpu.memory_space<vmem>>, vector<1x8x32xbf16>
    %1 = vector.shape_cast %0 : vector<1x8x32xbf16> to vector<8x32xbf16>
    %c0_2 = arith.constant 0 : index
    %c0_3 = arith.constant 0 : index
    %2 = vector.load %arg3[%c0_2, %c0_3] : memref<32x96xbf16, #tpu.memory_space<vmem>>, vector<32x96xbf16>
    %cst = arith.constant dense<0.000000e+00> : vector<8x96xf32>
    %3 = tpu.matmul %1, %2, %cst {dimension_numbers = #tpu.dot_dimension_numbers<[1], [0], [0], [1], [0, 0, 1, 1], [], []>} : vector<8x32xbf16>, vector<32x96xbf16>, vector<8x96xf32> -> vector<8x96xf32>
    %4 = arith.truncf %3 : vector<8x96xf32> to vector<8x96xbf16>
    %5 = vector.extract_strided_slice %4 {offsets = [0, 0], sizes = [8, 4], strides = [1, 1]} : vector<8x96xbf16> to vector<8x4xbf16>
    %c0_4 = arith.constant 0 : index
    %c0_5 = arith.constant 0 : index
    %c0_6 = arith.constant 0 : index
    %c0_7 = arith.constant 0 : index
    %6 = vector.load %arg4[%c0_4, %c0_5, %c0_6, %c0_7] : memref<1x8x8x4xbf16, #tpu.memory_space<vmem>>, vector<1x1x8x4xbf16>
    %7 = vector.shape_cast %6 : vector<1x1x8x4xbf16> to vector<8x4xbf16>
    %8 = vector.shape_cast %5 : vector<8x4xbf16> to vector<1x1x8x4xbf16>
    tpu.vector_store %arg4[%c0_4, %c0_5, %c0_6, %c0_7], %8 {strides = array<i32>} : memref<1x8x8x4xbf16, #tpu.memory_space<vmem>>, vector<1x1x8x4xbf16>,
    %9 = vector.extract_strided_slice %4 {offsets = [0, 32], sizes = [8, 4], strides = [1, 1]} : vector<8x96xbf16> to vector<8x4xbf16>
    %c0_8 = arith.constant 0 : index
    %c0_9 = arith.constant 0 : index
    %c0_10 = arith.constant 0 : index
    %c0_11 = arith.constant 0 : index
    %10 = vector.load %arg5[%c0_8, %c0_9, %c0_10, %c0_11] : memref<1x8x8x4xbf16, #tpu.memory_space<vmem>>, vector<1x1x8x4xbf16>
    %11 = vector.shape_cast %10 : vector<1x1x8x4xbf16> to vector<8x4xbf16>
    %12 = vector.shape_cast %9 : vector<8x4xbf16> to vector<1x1x8x4xbf16>
    tpu.vector_store %arg5[%c0_8, %c0_9, %c0_10, %c0_11], %12 {strides = array<i32>} : memref<1x8x8x4xbf16, #tpu.memory_space<vmem>>, vector<1x1x8x4xbf16>,
    %13 = vector.extract_strided_slice %4 {offsets = [0, 64], sizes = [8, 4], strides = [1, 1]} : vector<8x96xbf16> to vector<8x4xbf16>
    %c0_12 = arith.constant 0 : index
    %c0_13 = arith.constant 0 : index
    %c0_14 = arith.constant 0 : index
    %c0_15 = arith.constant 0 : index
    %14 = vector.load %arg6[%c0_12, %c0_13, %c0_14, %c0_15] : memref<1x8x8x4xbf16, #tpu.memory_space<vmem>>, vector<1x1x8x4xbf16>
    %15 = vector.shape_cast %14 : vector<1x1x8x4xbf16> to vector<8x4xbf16>
    %16 = vector.shape_cast %13 : vector<8x4xbf16> to vector<1x1x8x4xbf16>
    tpu.vector_store %arg6[%c0_12, %c0_13, %c0_14, %c0_15], %16 {strides = array<i32>} : memref<1x8x8x4xbf16, #tpu.memory_space<vmem>>, vector<1x1x8x4xbf16>,
    %17 = vector.extract_strided_slice %4 {offsets = [0, 4], sizes = [8, 4], strides = [1, 1]} : vector<8x96xbf16> to vector<8x4xbf16>
    %c0_16 = arith.constant 0 : index
    %c1 = arith.constant 1 : index
    %c0_17 = arith.constant 0 : index
    %c0_18 = arith.constant 0 : index
    %18 = vector.load %arg4[%c0_16, %c1, %c0_17, %c0_18] : memref<1x8x8x4xbf16, #tpu.memory_space<vmem>>, vector<1x1x8x4xbf16>
    %19 = vector.shape_cast %18 : vector<1x1x8x4xbf16> to vector<8x4xbf16>
    %20 = vector.shape_cast %17 : vector<8x4xbf16> to vector<1x1x8x4xbf16>
    tpu.vector_store %arg4[%c0_16, %c1, %c0_17, %c0_18], %20 {strides = array<i32>} : memref<1x8x8x4xbf16, #tpu.memory_space<vmem>>, vector<1x1x8x4xbf16>,
    %21 = vector.extract_strided_slice %4 {offsets = [0, 36], sizes = [8, 4], strides = [1, 1]} : vector<8x96xbf16> to vector<8x4xbf16>
    %c0_19 = arith.constant 0 : index
    %c1_20 = arith.constant 1 : index
    %c0_21 = arith.constant 0 : index
    %c0_22 = arith.constant 0 : index
    %22 = vector.load %arg5[%c0_19, %c1_20, %c0_21, %c0_22] : memref<1x8x8x4xbf16, #tpu.memory_space<vmem>>, vector<1x1x8x4xbf16>
    %23 = vector.shape_cast %22 : vector<1x1x8x4xbf16> to vector<8x4xbf16>
    %24 = vector.shape_cast %21 : vector<8x4xbf16> to vector<1x1x8x4xbf16>
    tpu.vector_store %arg5[%c0_19, %c1_20, %c0_21, %c0_22], %24 {strides = array<i32>} : memref<1x8x8x4xbf16, #tpu.memory_space<vmem>>, vector<1x1x8x4xbf16>,
    %25 = vector.extract_strided_slice %4 {offsets = [0, 68], sizes = [8, 4], strides = [1, 1]} : vector<8x96xbf16> to vector<8x4xbf16>
    %c0_23 = arith.constant 0 : index
    %c1_24 = arith.constant 1 : index
    %c0_25 = arith.constant 0 : index
    %c0_26 = arith.constant 0 : index
    %26 = vector.load %arg6[%c0_23, %c1_24, %c0_25, %c0_26] : memref<1x8x8x4xbf16, #tpu.memory_space<vmem>>, vector<1x1x8x4xbf16>
    %27 = vector.shape_cast %26 : vector<1x1x8x4xbf16> to vector<8x4xbf16>
    %28 = vector.shape_cast %25 : vector<8x4xbf16> to vector<1x1x8x4xbf16>
    tpu.vector_store %arg6[%c0_23, %c1_24, %c0_25, %c0_26], %28 {strides = array<i32>} : memref<1x8x8x4xbf16, #tpu.memory_space<vmem>>, vector<1x1x8x4xbf16>,
    %29 = vector.extract_strided_slice %4 {offsets = [0, 8], sizes = [8, 4], strides = [1, 1]} : vector<8x96xbf16> to vector<8x4xbf16>
    %c0_27 = arith.constant 0 : index
    %c2 = arith.constant 2 : index
    %c0_28 = arith.constant 0 : index
    %c0_29 = arith.constant 0 : index
    %30 = vector.load %arg4[%c0_27, %c2, %c0_28, %c0_29] : memref<1x8x8x4xbf16, #tpu.memory_space<vmem>>, vector<1x1x8x4xbf16>
    %31 = vector.shape_cast %30 : vector<1x1x8x4xbf16> to vector<8x4xbf16>
    %32 = vector.shape_cast %29 : vector<8x4xbf16> to vector<1x1x8x4xbf16>
    tpu.vector_store %arg4[%c0_27, %c2, %c0_28, %c0_29], %32 {strides = array<i32>} : memref<1x8x8x4xbf16, #tpu.memory_space<vmem>>, vector<1x1x8x4xbf16>,
    %33 = vector.extract_strided_slice %4 {offsets = [0, 40], sizes = [8, 4], strides = [1, 1]} : vector<8x96xbf16> to vector<8x4xbf16>
    %c0_30 = arith.constant 0 : index
    %c2_31 = arith.constant 2 : index
    %c0_32 = arith.constant 0 : index
    %c0_33 = arith.constant 0 : index
    %34 = vector.load %arg5[%c0_30, %c2_31, %c0_32, %c0_33] : memref<1x8x8x4xbf16, #tpu.memory_space<vmem>>, vector<1x1x8x4xbf16>
    %35 = vector.shape_cast %34 : vector<1x1x8x4xbf16> to vector<8x4xbf16>
    %36 = vector.shape_cast %33 : vector<8x4xbf16> to vector<1x1x8x4xbf16>
    tpu.vector_store %arg5[%c0_30, %c2_31, %c0_32, %c0_33], %36 {strides = array<i32>} : memref<1x8x8x4xbf16, #tpu.memory_space<vmem>>, vector<1x1x8x4xbf16>,
    %37 = vector.extract_strided_slice %4 {offsets = [0, 72], sizes = [8, 4], strides = [1, 1]} : vector<8x96xbf16> to vector<8x4xbf16>
    %c0_34 = arith.constant 0 : index
    %c2_35 = arith.constant 2 : index
    %c0_36 = arith.constant 0 : index
    %c0_37 = arith.constant 0 : index
    %38 = vector.load %arg6[%c0_34, %c2_35, %c0_36, %c0_37] : memref<1x8x8x4xbf16, #tpu.memory_space<vmem>>, vector<1x1x8x4xbf16>
    %39 = vector.shape_cast %38 : vector<1x1x8x4xbf16> to vector<8x4xbf16>
    %40 = vector.shape_cast %37 : vector<8x4xbf16> to vector<1x1x8x4xbf16>
    tpu.vector_store %arg6[%c0_34, %c2_35, %c0_36, %c0_37], %40 {strides = array<i32>} : memref<1x8x8x4xbf16, #tpu.memory_space<vmem>>, vector<1x1x8x4xbf16>,
    %41 = vector.extract_strided_slice %4 {offsets = [0, 12], sizes = [8, 4], strides = [1, 1]} : vector<8x96xbf16> to vector<8x4xbf16>
    %c0_38 = arith.constant 0 : index
    %c3 = arith.constant 3 : index
    %c0_39 = arith.constant 0 : index
    %c0_40 = arith.constant 0 : index
    %42 = vector.load %arg4[%c0_38, %c3, %c0_39, %c0_40] : memref<1x8x8x4xbf16, #tpu.memory_space<vmem>>, vector<1x1x8x4xbf16>
    %43 = vector.shape_cast %42 : vector<1x1x8x4xbf16> to vector<8x4xbf16>
    %44 = vector.shape_cast %41 : vector<8x4xbf16> to vector<1x1x8x4xbf16>
    tpu.vector_store %arg4[%c0_38, %c3, %c0_39, %c0_40], %44 {strides = array<i32>} : memref<1x8x8x4xbf16, #tpu.memory_space<vmem>>, vector<1x1x8x4xbf16>,
    %45 = vector.extract_strided_slice %4 {offsets = [0, 44], sizes = [8, 4], strides = [1, 1]} : vector<8x96xbf16> to vector<8x4xbf16>
    %c0_41 = arith.constant 0 : index
    %c3_42 = arith.constant 3 : index
    %c0_43 = arith.constant 0 : index
    %c0_44 = arith.constant 0 : index
    %46 = vector.load %arg5[%c0_41, %c3_42, %c0_43, %c0_44] : memref<1x8x8x4xbf16, #tpu.memory_space<vmem>>, vector<1x1x8x4xbf16>
    %47 = vector.shape_cast %46 : vector<1x1x8x4xbf16> to vector<8x4xbf16>
    %48 = vector.shape_cast %45 : vector<8x4xbf16> to vector<1x1x8x4xbf16>
    tpu.vector_store %arg5[%c0_41, %c3_42, %c0_43, %c0_44], %48 {strides = array<i32>} : memref<1x8x8x4xbf16, #tpu.memory_space<vmem>>, vector<1x1x8x4xbf16>,
    %49 = vector.extract_strided_slice %4 {offsets = [0, 76], sizes = [8, 4], strides = [1, 1]} : vector<8x96xbf16> to vector<8x4xbf16>
    %c0_45 = arith.constant 0 : index
    %c3_46 = arith.constant 3 : index
    %c0_47 = arith.constant 0 : index
    %c0_48 = arith.constant 0 : index
    %50 = vector.load %arg6[%c0_45, %c3_46, %c0_47, %c0_48] : memref<1x8x8x4xbf16, #tpu.memory_space<vmem>>, vector<1x1x8x4xbf16>
    %51 = vector.shape_cast %50 : vector<1x1x8x4xbf16> to vector<8x4xbf16>
    %52 = vector.shape_cast %49 : vector<8x4xbf16> to vector<1x1x8x4xbf16>
    tpu.vector_store %arg6[%c0_45, %c3_46, %c0_47, %c0_48], %52 {strides = array<i32>} : memref<1x8x8x4xbf16, #tpu.memory_space<vmem>>, vector<1x1x8x4xbf16>,
    %53 = vector.extract_strided_slice %4 {offsets = [0, 16], sizes = [8, 4], strides = [1, 1]} : vector<8x96xbf16> to vector<8x4xbf16>
    %c0_49 = arith.constant 0 : index
    %c4 = arith.constant 4 : index
    %c0_50 = arith.constant 0 : index
    %c0_51 = arith.constant 0 : index
    %54 = vector.load %arg4[%c0_49, %c4, %c0_50, %c0_51] : memref<1x8x8x4xbf16, #tpu.memory_space<vmem>>, vector<1x1x8x4xbf16>
    %55 = vector.shape_cast %54 : vector<1x1x8x4xbf16> to vector<8x4xbf16>
    %56 = vector.shape_cast %53 : vector<8x4xbf16> to vector<1x1x8x4xbf16>
    tpu.vector_store %arg4[%c0_49, %c4, %c0_50, %c0_51], %56 {strides = array<i32>} : memref<1x8x8x4xbf16, #tpu.memory_space<vmem>>, vector<1x1x8x4xbf16>,
    %57 = vector.extract_strided_slice %4 {offsets = [0, 48], sizes = [8, 4], strides = [1, 1]} : vector<8x96xbf16> to vector<8x4xbf16>
    %c0_52 = arith.constant 0 : index
    %c4_53 = arith.constant 4 : index
    %c0_54 = arith.constant 0 : index
    %c0_55 = arith.constant 0 : index
    %58 = vector.load %arg5[%c0_52, %c4_53, %c0_54, %c0_55] : memref<1x8x8x4xbf16, #tpu.memory_space<vmem>>, vector<1x1x8x4xbf16>
    %59 = vector.shape_cast %58 : vector<1x1x8x4xbf16> to vector<8x4xbf16>
    %60 = vector.shape_cast %57 : vector<8x4xbf16> to vector<1x1x8x4xbf16>
    tpu.vector_store %arg5[%c0_52, %c4_53, %c0_54, %c0_55], %60 {strides = array<i32>} : memref<1x8x8x4xbf16, #tpu.memory_space<vmem>>, vector<1x1x8x4xbf16>,
    %61 = vector.extract_strided_slice %4 {offsets = [0, 80], sizes = [8, 4], strides = [1, 1]} : vector<8x96xbf16> to vector<8x4xbf16>
    %c0_56 = arith.constant 0 : index
    %c4_57 = arith.constant 4 : index
    %c0_58 = arith.constant 0 : index
    %c0_59 = arith.constant 0 : index
    %62 = vector.load %arg6[%c0_56, %c4_57, %c0_58, %c0_59] : memref<1x8x8x4xbf16, #tpu.memory_space<vmem>>, vector<1x1x8x4xbf16>
    %63 = vector.shape_cast %62 : vector<1x1x8x4xbf16> to vector<8x4xbf16>
    %64 = vector.shape_cast %61 : vector<8x4xbf16> to vector<1x1x8x4xbf16>
    tpu.vector_store %arg6[%c0_56, %c4_57, %c0_58, %c0_59], %64 {strides = array<i32>} : memref<1x8x8x4xbf16, #tpu.memory_space<vmem>>, vector<1x1x8x4xbf16>,
    %65 = vector.extract_strided_slice %4 {offsets = [0, 20], sizes = [8, 4], strides = [1, 1]} : vector<8x96xbf16> to vector<8x4xbf16>
    %c0_60 = arith.constant 0 : index
    %c5 = arith.constant 5 : index
    %c0_61 = arith.constant 0 : index
    %c0_62 = arith.constant 0 : index
    %66 = vector.load %arg4[%c0_60, %c5, %c0_61, %c0_62] : memref<1x8x8x4xbf16, #tpu.memory_space<vmem>>, vector<1x1x8x4xbf16>
    %67 = vector.shape_cast %66 : vector<1x1x8x4xbf16> to vector<8x4xbf16>
    %68 = vector.shape_cast %65 : vector<8x4xbf16> to vector<1x1x8x4xbf16>
    tpu.vector_store %arg4[%c0_60, %c5, %c0_61, %c0_62], %68 {strides = array<i32>} : memref<1x8x8x4xbf16, #tpu.memory_space<vmem>>, vector<1x1x8x4xbf16>,
    %69 = vector.extract_strided_slice %4 {offsets = [0, 52], sizes = [8, 4], strides = [1, 1]} : vector<8x96xbf16> to vector<8x4xbf16>
    %c0_63 = arith.constant 0 : index
    %c5_64 = arith.constant 5 : index
    %c0_65 = arith.constant 0 : index
    %c0_66 = arith.constant 0 : index
    %70 = vector.load %arg5[%c0_63, %c5_64, %c0_65, %c0_66] : memref<1x8x8x4xbf16, #tpu.memory_space<vmem>>, vector<1x1x8x4xbf16>
    %71 = vector.shape_cast %70 : vector<1x1x8x4xbf16> to vector<8x4xbf16>
    %72 = vector.shape_cast %69 : vector<8x4xbf16> to vector<1x1x8x4xbf16>
    tpu.vector_store %arg5[%c0_63, %c5_64, %c0_65, %c0_66], %72 {strides = array<i32>} : memref<1x8x8x4xbf16, #tpu.memory_space<vmem>>, vector<1x1x8x4xbf16>,
    %73 = vector.extract_strided_slice %4 {offsets = [0, 84], sizes = [8, 4], strides = [1, 1]} : vector<8x96xbf16> to vector<8x4xbf16>
    %c0_67 = arith.constant 0 : index
    %c5_68 = arith.constant 5 : index
    %c0_69 = arith.constant 0 : index
    %c0_70 = arith.constant 0 : index
    %74 = vector.load %arg6[%c0_67, %c5_68, %c0_69, %c0_70] : memref<1x8x8x4xbf16, #tpu.memory_space<vmem>>, vector<1x1x8x4xbf16>
    %75 = vector.shape_cast %74 : vector<1x1x8x4xbf16> to vector<8x4xbf16>
    %76 = vector.shape_cast %73 : vector<8x4xbf16> to vector<1x1x8x4xbf16>
    tpu.vector_store %arg6[%c0_67, %c5_68, %c0_69, %c0_70], %76 {strides = array<i32>} : memref<1x8x8x4xbf16, #tpu.memory_space<vmem>>, vector<1x1x8x4xbf16>,
    %77 = vector.extract_strided_slice %4 {offsets = [0, 24], sizes = [8, 4], strides = [1, 1]} : vector<8x96xbf16> to vector<8x4xbf16>
    %c0_71 = arith.constant 0 : index
    %c6 = arith.constant 6 : index
    %c0_72 = arith.constant 0 : index
    %c0_73 = arith.constant 0 : index
    %78 = vector.load %arg4[%c0_71, %c6, %c0_72, %c0_73] : memref<1x8x8x4xbf16, #tpu.memory_space<vmem>>, vector<1x1x8x4xbf16>
    %79 = vector.shape_cast %78 : vector<1x1x8x4xbf16> to vector<8x4xbf16>
    %80 = vector.shape_cast %77 : vector<8x4xbf16> to vector<1x1x8x4xbf16>
    tpu.vector_store %arg4[%c0_71, %c6, %c0_72, %c0_73], %80 {strides = array<i32>} : memref<1x8x8x4xbf16, #tpu.memory_space<vmem>>, vector<1x1x8x4xbf16>,
    %81 = vector.extract_strided_slice %4 {offsets = [0, 56], sizes = [8, 4], strides = [1, 1]} : vector<8x96xbf16> to vector<8x4xbf16>
    %c0_74 = arith.constant 0 : index
    %c6_75 = arith.constant 6 : index
    %c0_76 = arith.constant 0 : index
    %c0_77 = arith.constant 0 : index
    %82 = vector.load %arg5[%c0_74, %c6_75, %c0_76, %c0_77] : memref<1x8x8x4xbf16, #tpu.memory_space<vmem>>, vector<1x1x8x4xbf16>
    %83 = vector.shape_cast %82 : vector<1x1x8x4xbf16> to vector<8x4xbf16>
    %84 = vector.shape_cast %81 : vector<8x4xbf16> to vector<1x1x8x4xbf16>
    tpu.vector_store %arg5[%c0_74, %c6_75, %c0_76, %c0_77], %84 {strides = array<i32>} : memref<1x8x8x4xbf16, #tpu.memory_space<vmem>>, vector<1x1x8x4xbf16>,
    %85 = vector.extract_strided_slice %4 {offsets = [0, 88], sizes = [8, 4], strides = [1, 1]} : vector<8x96xbf16> to vector<8x4xbf16>
    %c0_78 = arith.constant 0 : index
    %c6_79 = arith.constant 6 : index
    %c0_80 = arith.constant 0 : index
    %c0_81 = arith.constant 0 : index
    %86 = vector.load %arg6[%c0_78, %c6_79, %c0_80, %c0_81] : memref<1x8x8x4xbf16, #tpu.memory_space<vmem>>, vector<1x1x8x4xbf16>
    %87 = vector.shape_cast %86 : vector<1x1x8x4xbf16> to vector<8x4xbf16>
    %88 = vector.shape_cast %85 : vector<8x4xbf16> to vector<1x1x8x4xbf16>
    tpu.vector_store %arg6[%c0_78, %c6_79, %c0_80, %c0_81], %88 {strides = array<i32>} : memref<1x8x8x4xbf16, #tpu.memory_space<vmem>>, vector<1x1x8x4xbf16>,
    %89 = vector.extract_strided_slice %4 {offsets = [0, 28], sizes = [8, 4], strides = [1, 1]} : vector<8x96xbf16> to vector<8x4xbf16>
    %c0_82 = arith.constant 0 : index
    %c7 = arith.constant 7 : index
    %c0_83 = arith.constant 0 : index
    %c0_84 = arith.constant 0 : index
    %90 = vector.load %arg4[%c0_82, %c7, %c0_83, %c0_84] : memref<1x8x8x4xbf16, #tpu.memory_space<vmem>>, vector<1x1x8x4xbf16>
    %91 = vector.shape_cast %90 : vector<1x1x8x4xbf16> to vector<8x4xbf16>
    %92 = vector.shape_cast %89 : vector<8x4xbf16> to vector<1x1x8x4xbf16>
    tpu.vector_store %arg4[%c0_82, %c7, %c0_83, %c0_84], %92 {strides = array<i32>} : memref<1x8x8x4xbf16, #tpu.memory_space<vmem>>, vector<1x1x8x4xbf16>,
    %93 = vector.extract_strided_slice %4 {offsets = [0, 60], sizes = [8, 4], strides = [1, 1]} : vector<8x96xbf16> to vector<8x4xbf16>
    %c0_85 = arith.constant 0 : index
    %c7_86 = arith.constant 7 : index
    %c0_87 = arith.constant 0 : index
    %c0_88 = arith.constant 0 : index
    %94 = vector.load %arg5[%c0_85, %c7_86, %c0_87, %c0_88] : memref<1x8x8x4xbf16, #tpu.memory_space<vmem>>, vector<1x1x8x4xbf16>
    %95 = vector.shape_cast %94 : vector<1x1x8x4xbf16> to vector<8x4xbf16>
    %96 = vector.shape_cast %93 : vector<8x4xbf16> to vector<1x1x8x4xbf16>
    tpu.vector_store %arg5[%c0_85, %c7_86, %c0_87, %c0_88], %96 {strides = array<i32>} : memref<1x8x8x4xbf16, #tpu.memory_space<vmem>>, vector<1x1x8x4xbf16>,
    %97 = vector.extract_strided_slice %4 {offsets = [0, 92], sizes = [8, 4], strides = [1, 1]} : vector<8x96xbf16> to vector<8x4xbf16>
    %c0_89 = arith.constant 0 : index
    %c7_90 = arith.constant 7 : index
    %c0_91 = arith.constant 0 : index
    %c0_92 = arith.constant 0 : index
    %98 = vector.load %arg6[%c0_89, %c7_90, %c0_91, %c0_92] : memref<1x8x8x4xbf16, #tpu.memory_space<vmem>>, vector<1x1x8x4xbf16>
    %99 = vector.shape_cast %98 : vector<1x1x8x4xbf16> to vector<8x4xbf16>
    %100 = vector.shape_cast %97 : vector<8x4xbf16> to vector<1x1x8x4xbf16>
    tpu.vector_store %arg6[%c0_89, %c7_90, %c0_91, %c0_92], %100 {strides = array<i32>} : memref<1x8x8x4xbf16, #tpu.memory_space<vmem>>, vector<1x1x8x4xbf16>,
    return
  }
  func.func @transform_0(%arg0: i32, %arg1: i32) -> (i32, i32, i32) {
    %c0_i32 = arith.constant 0 : i32
    %c0_i32_0 = arith.constant 0 : i32
    return %arg0, %arg1, %c0_i32 : i32, i32, i32
  }
  func.func @transform_1(%arg0: i32, %arg1: i32) -> (i32, i32) {
    %c0_i32 = arith.constant 0 : i32
    %c0_i32_0 = arith.constant 0 : i32
    %c0_i32_1 = arith.constant 0 : i32
    return %c0_i32, %c0_i32_0 : i32, i32
  }
  func.func @transform_2(%arg0: i32, %arg1: i32) -> (i32, i32, i32, i32) {
    %c0_i32 = arith.constant 0 : i32
    %c0_i32_0 = arith.constant 0 : i32
    %c0_i32_1 = arith.constant 0 : i32
    return %arg0, %c0_i32, %arg1, %c0_i32_0 : i32, i32, i32, i32
  }
  func.func @transform_3(%arg0: i32, %arg1: i32) -> (i32, i32, i32, i32) {
    %c0_i32 = arith.constant 0 : i32
    %c0_i32_0 = arith.constant 0 : i32
    %c0_i32_1 = arith.constant 0 : i32
    return %arg0, %c0_i32, %arg1, %c0_i32_0 : i32, i32, i32, i32
  }
  func.func @transform_4(%arg0: i32, %arg1: i32) -> (i32, i32, i32, i32) {
    %c0_i32 = arith.constant 0 : i32
    %c0_i32_0 = arith.constant 0 : i32
    %c0_i32_1 = arith.constant 0 : i32
    return %arg0, %c0_i32, %arg1, %c0_i32_0 : i32, i32, i32, i32
  }
}

</mosaic_0001>

<llo_original>
// kernel: tpu_custom_call.1
$region0: #{tpu_custom_call.1}
  #allocation0 [shape = 'u32[]', space=smem, size = 0x4, offset = 0x4, fixed_abs, tag = 'smem constant byte address 0x4 - core index']
  #allocation1 [shape = 'u32[144,128]{1,0:T(1,128)}', space=vmem, size = 0x12000, scoped, tag = 'internal scratch']
  %s0 = inlined_call_operand.hbm [shape: bf16[2,16,32], index: 0, kind: input, shape index: {}]
  %s1 = inlined_call_operand.hbm [shape: bf16[32,96], index: 1, kind: input, shape index: {}]
  %s2 = inlined_call_operand.vmem [shape: bf16[2,8,16,4], index: 2, kind: output, shape index: {0}]
  %s3 = inlined_call_operand.vmem [shape: bf16[2,8,16,4], index: 3, kind: output, shape index: {1}]
  %s4 = inlined_call_operand.vmem [shape: bf16[2,8,16,4], index: 4, kind: output, shape index: {2}]
  %5 = xla_tuple %s2, %s3, %s4
  %s6 = sld [smem:[#allocation0]]
  $region176: #{tpu_custom_call.1} parent=0
    _
  %s8 = ssub.s32 1, %s6
  %s9 = scalar_select 0, %s8, %s6
  $region1: #{tpu_custom_call.1} parent=0
    #allocation2 [shape = 'u8[4096]{0}', space=vmem, size = 0x1000, scoped, tag = 'input window, operand 0']
    #allocation3 [shape = 's32[2]{0}', space=sflag, size = 0x8, scoped, tag = 'scoped memory for tpu_custom_call.1']
    #allocation4 [shape = 'u8[8192]{0}', space=vmem, size = 0x2000, scoped, tag = 'input window, operand 1, single buffered']
    #allocation5 [shape = 's32[1]{0}', space=sflag, size = 0x4, scoped, tag = 'scoped memory for tpu_custom_call.1']
    #allocation6 [shape = 'u8[32768]{0}', space=vmem, size = 0x8000, scoped, tag = 'output window, operand 0']
    #allocation7 [shape = 'u8[32768]{0}', space=vmem, size = 0x8000, scoped, tag = 'output window, operand 1']
    #allocation8 [shape = 'u8[32768]{0}', space=vmem, size = 0x8000, scoped, tag = 'output window, operand 2']
    %10 = vsyncpa [#allocation3], 0
    %s11 = scalar_lea.sflag [#allocation3], 1
    %12 = vsyncpa %s11, 0
    %13 = vsyncpa [#allocation5], 0
    loop: start=0, step=1, limit=6
    $region2: #{tpu_custom_call.1} parent=1 // loop_pre_header
      _
    $region3: #{tpu_custom_call.1} parent=1 // loop_header
      %s15 = sphi 0, %s19
      %p16 = scmp.ge.s32.totalorder %s15, 6
      %s22 = sphi 0, %s34
      %s23 = sphi 0, %s30
      %s24 = sphi 0, %s22
      %s25 = sphi 0, %s23
      %s26 = sphi 0, %s24
      %s27 = sphi 0, %s25
      %s39 = sphi 0, %s41
      %s42 = sphi 0, %s39
      %s43 = sphi 0, %s42
      %s59 = sphi 0, %s43
      %s63 = sphi 0, %s63
      %s65 = sphi 0, %s63
      %s66 = sphi 0, %s65
      %s80 = sphi 0, %s66
      %s88 = sphi 0, %s90
      %s91 = sphi 0, %s88
      %s92 = sphi 0, %s91
      %s108 = sphi 0, %s92
      %s116 = sphi 0, %s118
      %s119 = sphi 0, %s116
      %s120 = sphi 0, %s119
      %s136 = sphi 0, %s120
      %s144 = sphi 0, %s146
      %s147 = sphi 0, %s144
      %s148 = sphi 0, %s147
      %s164 = sphi 0, %s148
    $region4: #{tpu_custom_call.1} parent=1 // loop_header_branch
      %18 = sbr.rel (%p16) target = $region8
    $region5: #{tpu_custom_call.1} parent=1 // loop_body
      %s20 = ssub.s32 %s15, 1
      %s21 = ssub.s32 %s15, 2
      %s28 = sadd.s32 1, %s23
      %p29 = scmp.ge.s32.totalorder %s28, 2
      %s30 = scalar_select %p29, 0, %s28
      %s31 = sadd.s32 1, %s22
      %s32 = scalar_select %p29, %s31, %s22
      %p33 = scmp.ge.s32.totalorder %s32, 2
      %s34 = scalar_select %p33, 0, %s32
      %s35 = ssub.s32 %s22, %s34
      %s36 = ssub.s32 %s23, %s30
      %s37 = sor.u32 %s35, %s36
      %p38 = scmp.eq.s32.totalorder %s37, 0
      %s40 = sadd.s32 %s39, 1
      %s41 = scalar_select %p38, %s39, %s40
      %p44 = pneg %p38
      %p45 = scmp.eq.s32.totalorder %s15, 3
      %p46 = por %p44, %p45
      %p47 = scmp.ne.s32.totalorder %s39, %s42
      %p48 = scmp.eq.s32.totalorder %s15, 0
      %p49 = por %p47, %p48
      %p50 = scmp.ne.s32.totalorder %s39, %s42
      %p51 = scmp.eq.s32.totalorder %s20, 3
      %p52 = por %p50, %p51
      %p53 = scmp.ne.s32.totalorder %s42, %s43
      %p54 = scmp.eq.s32.totalorder %s20, 0
      %p55 = por %p53, %p54
      %p56 = scmp.ne.s32.totalorder %s42, %s43
      %p57 = scmp.eq.s32.totalorder %s21, 3
      %p58 = por %p56, %p57
      %p60 = scmp.ne.s32.totalorder %s43, %s59
      %p61 = scmp.eq.s32.totalorder %s21, 0
      %p62 = por %p60, %p61
      %s64 = sadd.s32 %s63, 1
      %p67 = scmp.eq.s32.totalorder %s15, 3
      %p68 = scmp.ne.s32.totalorder %s63, %s65
      %p69 = scmp.eq.s32.totalorder %s15, 0
      %p70 = por %p68, %p69
      %p71 = scmp.ne.s32.totalorder %s63, %s65
      %p72 = scmp.eq.s32.totalorder %s20, 3
      %p73 = por %p71, %p72
      %p74 = scmp.ne.s32.totalorder %s65, %s66
      %p75 = scmp.eq.s32.totalorder %s20, 0
      %p76 = por %p74, %p75
      %p77 = scmp.ne.s32.totalorder %s65, %s66
      %p78 = scmp.eq.s32.totalorder %s21, 3
      %p79 = por %p77, %p78
      %p81 = scmp.ne.s32.totalorder %s66, %s80
      %p82 = scmp.eq.s32.totalorder %s21, 0
      %p83 = por %p81, %p82
      %s84 = ssub.s32 %s22, %s34
      %s85 = ssub.s32 %s23, %s30
      %s86 = sor.u32 %s84, %s85
      %p87 = scmp.eq.s32.totalorder %s86, 0
      %s89 = sadd.s32 %s88, 1
      %s90 = scalar_select %p87, %s88, %s89
      %p93 = pneg %p87
      %p94 = scmp.eq.s32.totalorder %s15, 3
      %p95 = por %p93, %p94
      %p96 = scmp.ne.s32.totalorder %s88, %s91
      %p97 = scmp.eq.s32.totalorder %s15, 0
      %p98 = por %p96, %p97
      %p99 = scmp.ne.s32.totalorder %s88, %s91
      %p100 = scmp.eq.s32.totalorder %s20, 3
      %p101 = por %p99, %p100
      %p102 = scmp.ne.s32.totalorder %s91, %s92
      %p103 = scmp.eq.s32.totalorder %s20, 0
      %p104 = por %p102, %p103
      %p105 = scmp.ne.s32.totalorder %s91, %s92
      %p106 = scmp.eq.s32.totalorder %s21, 3
      %p107 = por %p105, %p106
      %p109 = scmp.ne.s32.totalorder %s92, %s108
      %p110 = scmp.eq.s32.totalorder %s21, 0
      %p111 = por %p109, %p110
      %s112 = ssub.s32 %s22, %s34
      %s113 = ssub.s32 %s23, %s30
      %s114 = sor.u32 %s112, %s113
      %p115 = scmp.eq.s32.totalorder %s114, 0
      %s117 = sadd.s32 %s116, 1
      %s118 = scalar_select %p115, %s116, %s117
      %p121 = pneg %p115
      %p122 = scmp.eq.s32.totalorder %s15, 3
      %p123 = por %p121, %p122
      %p124 = scmp.ne.s32.totalorder %s116, %s119
      %p125 = scmp.eq.s32.totalorder %s15, 0
      %p126 = por %p124, %p125
      %p127 = scmp.ne.s32.totalorder %s116, %s119
      %p128 = scmp.eq.s32.totalorder %s20, 3
      %p129 = por %p127, %p128
      %p130 = scmp.ne.s32.totalorder %s119, %s120
      %p131 = scmp.eq.s32.totalorder %s20, 0
      %p132 = por %p130, %p131
      %p133 = scmp.ne.s32.totalorder %s119, %s120
      %p134 = scmp.eq.s32.totalorder %s21, 3
      %p135 = por %p133, %p134
      %p137 = scmp.ne.s32.totalorder %s120, %s136
      %p138 = scmp.eq.s32.totalorder %s21, 0
      %p139 = por %p137, %p138
      %s140 = ssub.s32 %s22, %s34
      %s141 = ssub.s32 %s23, %s30
      %s142 = sor.u32 %s140, %s141
      %p143 = scmp.eq.s32.totalorder %s142, 0
      %s145 = sadd.s32 %s144, 1
      %s146 = scalar_select %p143, %s144, %s145
      %p149 = pneg %p143
      %p150 = scmp.eq.s32.totalorder %s15, 3
      %p151 = por %p149, %p150
      %p152 = scmp.ne.s32.totalorder %s144, %s147
      %p153 = scmp.eq.s32.totalorder %s15, 0
      %p154 = por %p152, %p153
      %p155 = scmp.ne.s32.totalorder %s144, %s147
      %p156 = scmp.eq.s32.totalorder %s20, 3
      %p157 = por %p155, %p156
      %p158 = scmp.ne.s32.totalorder %s147, %s148
      %p159 = scmp.eq.s32.totalorder %s20, 0
      %p160 = por %p158, %p159
      %p161 = scmp.ne.s32.totalorder %s147, %s148
      %p162 = scmp.eq.s32.totalorder %s21, 3
      %p163 = por %p161, %p162
      %p165 = scmp.ne.s32.totalorder %s148, %s164
      %p166 = scmp.eq.s32.totalorder %s21, 0
      %p167 = por %p165, %p166
      %p168 = scmp.le.s32.totalorder 1, %s15
      %p169 = scmp.lt.s32.totalorder %s15, 5
      %p170 = pnand %p168, %p169
      %p171 = pneg %p170
      // Predicated region
      $region9: #{tpu_custom_call.1} parent=5 // pred_check
        _
      $region10: #{tpu_custom_call.1} parent=5 // pred_check_branch
        %173 = sbr.rel (%p170) target = $region12
      $region11: #{tpu_custom_call.1} parent=5 // pred_region
        %s174 = ssub.s32 %s15, 1
        // Predicated region
        $region13: #{tpu_custom_call.1} parent=11 // pred_check
          %p175 = pneg %p76
        $region14: #{tpu_custom_call.1} parent=11 // pred_check_branch
          %177 = sbr.rel (%p175) target = $region16
        $region15: #{tpu_custom_call.1} parent=11 // pred_region
          %s179 = ssub.s32 256, 256
          %180 = vsyncadd [#allocation5], %s179
          %s181 = sshll.u32 [#allocation4], 4
          %s182 = int_to_ptr.vmem [resolvable:$true] %s181
          %187 = dma.hbm_to_vmem [thread:$0]  %s1, 256, %s182, [#allocation5], 64, 64, 4
        $region16: #{tpu_custom_call.1} parent=11 // pred_fallthru
          _
      $region12: #{tpu_custom_call.1} parent=5 // pred_fallthru
        _
      %p188 = scmp.lt.s32.totalorder %s15, 4
      // Predicated region
      $region17: #{tpu_custom_call.1} parent=5 // pred_check
        %p189 = pneg %p188
      $region18: #{tpu_custom_call.1} parent=5 // pred_check_branch
        %191 = sbr.rel (%p189) target = $region20
      $region19: #{tpu_custom_call.1} parent=5 // pred_region
        // Predicated region
        $region21: #{tpu_custom_call.1} parent=19 // pred_check
          %p192 = pneg %p49
        $region22: #{tpu_custom_call.1} parent=19 // pred_check_branch
          %194 = sbr.rel (%p192) target = $region24
        $region23: #{tpu_custom_call.1} parent=19 // pred_region
          %s195 = sand.u32 %s39, 1
          %s196 = scalar_lea.sflag [#allocation3], %s195
          %s197 = sand.u32 %s39, 1
          %s198 = smul.addr %s197, 4
          %s199 = scalar_lea.vmem [#allocation2], %s198
          %s201 = ssub.s32 64, 64
          %202 = vsyncadd %s196, %s201
          %s203 = smul.addr %s22, 2
          %s204 = sadd.s32 %s23, %s203
          %s205 = smul.addr %s204, 64
          %s206 = scalar_lea.hbm %s0, %s205
          %s208 = sshll.u32 %s199, 4
          %s209 = int_to_ptr.vmem [resolvable:$true] %s208
          %211 = dma.hbm_to_vmem [thread:$0]  %s206, 64, %s209, %s196
        $region24: #{tpu_custom_call.1} parent=19 // pred_fallthru
          _
      $region20: #{tpu_custom_call.1} parent=5 // pred_fallthru
        _
      %p212 = scmp.le.s32.totalorder 1, %s15
      %p213 = scmp.lt.s32.totalorder %s15, 5
      %p214 = pnand %p212, %p213
      %p215 = pneg %p214
      // Predicated region
      $region25: #{tpu_custom_call.1} parent=5 // pred_check
        _
      $region26: #{tpu_custom_call.1} parent=5 // pred_check_branch
        %217 = sbr.rel (%p214) target = $region28
      $region27: #{tpu_custom_call.1} parent=5 // pred_region
        %s218 = ssub.s32 %s15, 1
        %s219 = sand.u32 %s42, 1
        %s220 = scalar_lea.sflag [#allocation3], %s219
        %s221 = sand.u32 %s42, 1
        %s222 = smul.addr %s221, 4
        %s223 = scalar_lea.vmem [#allocation2], %s222
        // Predicated region
        $region29: #{tpu_custom_call.1} parent=27 // pred_check
          %p224 = pneg %p55
        $region30: #{tpu_custom_call.1} parent=27 // pred_check_branch
          %226 = sbr.rel (%p224) target = $region32
        $region31: #{tpu_custom_call.1} parent=27 // pred_region
          %227 = dma.done %s220, 64
        $region32: #{tpu_custom_call.1} parent=27 // pred_fallthru
          _
        // Predicated region
        $region33: #{tpu_custom_call.1} parent=27 // pred_check
          %p228 = pneg %p76
        $region34: #{tpu_custom_call.1} parent=27 // pred_check_branch
          %230 = sbr.rel (%p228) target = $region36
        $region35: #{tpu_custom_call.1} parent=27 // pred_region
          %231 = dma.done [#allocation5], 256
        $region36: #{tpu_custom_call.1} parent=27 // pred_fallthru
          _
        %s232 = sand.u32 %s42, 1
        %s233 = scalar_lea.sflag [#allocation3], %s232
        %s234 = sand.u32 %s42, 1
        %s235 = smul.addr %s234, 4
        %s236 = scalar_lea.vmem [#allocation2], %s235
        %p237 = pneg %p55
        %p238 = pneg %p52
        %p239 = pneg %p76
        %p240 = pneg %p73
        %p241 = pneg %p104
        %p242 = pneg %p101
        %s243 = sand.u32 %s91, 1
        %s244 = sand.u32 %s91, 1
        %s245 = smul.addr %s244, 32
        %s246 = scalar_lea.vmem [#allocation6], %s245
        %p247 = pneg %p132
        %p248 = pneg %p129
        %s249 = sand.u32 %s119, 1
        %s250 = sand.u32 %s119, 1
        %s251 = smul.addr %s250, 32
        %s252 = scalar_lea.vmem [#allocation7], %s251
        %p253 = pneg %p160
        %p254 = pneg %p157
        %s255 = sand.u32 %s147, 1
        %s256 = sand.u32 %s147, 1
        %s257 = smul.addr %s256, 32
        %s258 = scalar_lea.vmem [#allocation8], %s257
        %v260 = vld [vmem:[%s223] sm:$0xf]
        %v261 = vld [vmem:[#allocation4] sm:$0xf]
        %v262 = vld [vmem:[#allocation4 + $0x4] sm:$0xf]
        %v263 = vld [vmem:[#allocation4 + $0x8] sm:$0xf]
        %v264 = vld [vmem:[#allocation4 + $0xc] sm:$0xf]
        %v269 = vunpack.c.l.b16 %v261
        %v270 = vunpack.c.l.b16 %v262
        %v271 = vunpack.c.l.b16 %v263
        %v272 = vunpack.c.l.b16 %v264
        %v273 = vpack.c.b16 %v270, %v269
        %v274 = vpack.c.b16 %v272, %v271
        %vm277 = vcmask 261120
        %v279 = vsel %vm277, %v260, 0
        %281 = vmatprep.subr.bf16.mxu0 0
        %282 = vmatpush1.bf16.msra.mxu0 %v273
        %283 = vmatprep.subr.bf16.mxu0 0
        %284 = vmatpush1.bf16.msra.mxu0 %v274
        %285 = vmatprep.subr.bf16.mxu0 0
        %286 = vmatpush1.bf16.msra.mxu0 0
        %287 = vmatprep.subr.bf16.mxu0 0
        %288 = vmatpush1.bf16.msra.mxu0 0
        %289 = vmatprep.subr.bf16.mxu0 0
        %290 = vmatpush1.bf16.msra.mxu0 0
        %291 = vmatprep.subr.bf16.mxu0 0
        %292 = vmatpush1.bf16.msra.mxu0 0
        %293 = vmatprep.subr.bf16.mxu0 0
        %294 = vmatpush1.bf16.msra.mxu0 0
        %295 = vmatprep.subr.bf16.mxu0 0
        %296 = vmatpush1.bf16.msra.mxu0 0
        %297 = vmatprep.subr.bf16.mxu0 0
        %298 = vmatpush1.bf16.msra.mxu0 0
        %299 = vmatprep.subr.bf16.mxu0 0
        %300 = vmatpush1.bf16.msra.mxu0 0
        %301 = vmatprep.subr.bf16.mxu0 0
        %302 = vmatpush1.bf16.msra.mxu0 0
        %303 = vmatprep.subr.bf16.mxu0 0
        %304 = vmatpush1.bf16.msra.mxu0 0
        %305 = vmatprep.subr.bf16.mxu0 0
        %306 = vmatpush1.bf16.msra.mxu0 0
        %307 = vmatprep.subr.bf16.mxu0 0
        %308 = vmatpush1.bf16.msra.mxu0 0
        %309 = vmatprep.subr.bf16.mxu0 0
        %310 = vmatpush1.bf16.msra.mxu0 0
        %311 = vmatprep.subr.bf16.mxu0 0
        %312 = vmatpush1.bf16.msra.mxu0 0
        %313 = vmatprep.mubr.bf16.mxu0 0
        %314 = vmatmul.mubr.bf16.gmra.mrb[0].mxu0 %v279
        %v315 = vpop.f32.mrb[0].mxu0
        %v316 = vadd.f32 0.0, %v315
        %v317 = vpop.f32.mrb[0].mxu0
        %v318 = vpop.f32.mrb[0].mxu0
        %v319 = vpop.f32.mrb[0].mxu0
        %320 = vdwg.mxu0
        %v321 = vpack.c.bf16 %v316, %v316
        %vm322 = vcmask 27648
        %323 = vst.msk [vmem:[%s246] sm:$0xf] %vm322, %v321
        %v325 = vunpack.c.l.b16 %v321
        %v326 = vpack.c.b16 %v325, %v325
        %327 = vrot.lane.b32.xlu0 %v326, 96
        %v328 = vpop.permute.xlu0 %327
        %330 = vst.msk [vmem:[%s252] sm:$0xf] %vm322, %v328
        %331 = vrot.lane.b32.xlu0 %v326, 64
        %v332 = vpop.permute.xlu0 %331
        %334 = vst.msk [vmem:[%s258] sm:$0xf] %vm322, %v332
        %335 = vrot.lane.b32.xlu0 %v326, 124
        %v336 = vpop.permute.xlu0 %335
        %s338 = scalar_lea.vmem %s246, 4 [#allocation6]
        %339 = vst.msk [vmem:[%s338] sm:$0xf] %vm322, %v336
        %340 = vrot.lane.b32.xlu0 %v326, 92
        %v341 = vpop.permute.xlu0 %340
        %s343 = scalar_lea.vmem %s252, 4 [#allocation7]
        %344 = vst.msk [vmem:[%s343] sm:$0xf] %vm322, %v341
        %345 = vrot.lane.b32.xlu0 %v326, 60
        %v346 = vpop.permute.xlu0 %345
        %s348 = scalar_lea.vmem %s258, 4 [#allocation8]
        %349 = vst.msk [vmem:[%s348] sm:$0xf] %vm322, %v346
        %350 = vrot.lane.b32.xlu0 %v326, 120
        %v351 = vpop.permute.xlu0 %350
        %s353 = scalar_lea.vmem %s246, 8 [#allocation6]
        %354 = vst.msk [vmem:[%s353] sm:$0xf] %vm322, %v351
        %355 = vrot.lane.b32.xlu0 %v326, 88
        %v356 = vpop.permute.xlu0 %355
        %s358 = scalar_lea.vmem %s252, 8 [#allocation7]
        %359 = vst.msk [vmem:[%s358] sm:$0xf] %vm322, %v356
        %360 = vrot.lane.b32.xlu0 %v326, 56
        %v361 = vpop.permute.xlu0 %360
        %s363 = scalar_lea.vmem %s258, 8 [#allocation8]
        %364 = vst.msk [vmem:[%s363] sm:$0xf] %vm322, %v361
        %365 = vrot.lane.b32.xlu0 %v326, 116
        %v366 = vpop.permute.xlu0 %365
        %s368 = scalar_lea.vmem %s246, 12 [#allocation6]
        %369 = vst.msk [vmem:[%s368] sm:$0xf] %vm322, %v366
        %370 = vrot.lane.b32.xlu0 %v326, 84
        %v371 = vpop.permute.xlu0 %370
        %s373 = scalar_lea.vmem %s252, 12 [#allocation7]
        %374 = vst.msk [vmem:[%s373] sm:$0xf] %vm322, %v371
        %375 = vrot.lane.b32.xlu0 %v326, 52
        %v376 = vpop.permute.xlu0 %375
        %s378 = scalar_lea.vmem %s258, 12 [#allocation8]
        %379 = vst.msk [vmem:[%s378] sm:$0xf] %vm322, %v376
        %380 = vrot.lane.b32.xlu0 %v326, 112
        %v381 = vpop.permute.xlu0 %380
        %s383 = scalar_lea.vmem %s246, 16 [#allocation6]
        %384 = vst.msk [vmem:[%s383] sm:$0xf] %vm322, %v381
        %385 = vrot.lane.b32.xlu0 %v326, 80
        %v386 = vpop.permute.xlu0 %385
        %s388 = scalar_lea.vmem %s252, 16 [#allocation7]
        %389 = vst.msk [vmem:[%s388] sm:$0xf] %vm322, %v386
        %390 = vrot.lane.b32.xlu0 %v326, 48
        %v391 = vpop.permute.xlu0 %390
        %s393 = scalar_lea.vmem %s258, 16 [#allocation8]
        %394 = vst.msk [vmem:[%s393] sm:$0xf] %vm322, %v391
        %395 = vrot.lane.b32.xlu0 %v326, 108
        %v396 = vpop.permute.xlu0 %395
        %s398 = scalar_lea.vmem %s246, 20 [#allocation6]
        %399 = vst.msk [vmem:[%s398] sm:$0xf] %vm322, %v396
        %400 = vrot.lane.b32.xlu0 %v326, 76
        %v401 = vpop.permute.xlu0 %400
        %s403 = scalar_lea.vmem %s252, 20 [#allocation7]
        %404 = vst.msk [vmem:[%s403] sm:$0xf] %vm322, %v401
        %405 = vrot.lane.b32.xlu0 %v326, 44
        %v406 = vpop.permute.xlu0 %405
        %s408 = scalar_lea.vmem %s258, 20 [#allocation8]
        %409 = vst.msk [vmem:[%s408] sm:$0xf] %vm322, %v406
        %410 = vrot.lane.b32.xlu0 %v326, 104
        %v411 = vpop.permute.xlu0 %410
        %s413 = scalar_lea.vmem %s246, 24 [#allocation6]
        %414 = vst.msk [vmem:[%s413] sm:$0xf] %vm322, %v411
        %415 = vrot.lane.b32.xlu0 %v326, 72
        %v416 = vpop.permute.xlu0 %415
        %s418 = scalar_lea.vmem %s252, 24 [#allocation7]
        %419 = vst.msk [vmem:[%s418] sm:$0xf] %vm322, %v416
        %420 = vrot.lane.b32.xlu0 %v326, 40
        %v421 = vpop.permute.xlu0 %420
        %s423 = scalar_lea.vmem %s258, 24 [#allocation8]
        %424 = vst.msk [vmem:[%s423] sm:$0xf] %vm322, %v421
        %425 = vrot.lane.b32.xlu0 %v326, 100
        %v426 = vpop.permute.xlu0 %425
        %s428 = scalar_lea.vmem %s246, 28 [#allocation6]
        %429 = vst.msk [vmem:[%s428] sm:$0xf] %vm322, %v426
        %430 = vrot.lane.b32.xlu0 %v326, 68
        %v431 = vpop.permute.xlu0 %430
        %s433 = scalar_lea.vmem %s252, 28 [#allocation7]
        %434 = vst.msk [vmem:[%s433] sm:$0xf] %vm322, %v431
        %435 = vrot.lane.b32.xlu0 %v326, 36
        %v436 = vpop.permute.xlu0 %435
        %s438 = scalar_lea.vmem %s258, 28 [#allocation8]
        %439 = vst.msk [vmem:[%s438] sm:$0xf] %vm322, %v436
        %s440 = sand.u32 %s91, 1
        %s441 = sand.u32 %s91, 1
        %s442 = smul.addr %s441, 32
        %s443 = scalar_lea.vmem [#allocation6], %s442
        %s444 = sand.u32 %s119, 1
        %s445 = sand.u32 %s119, 1
        %s446 = smul.addr %s445, 32
        %s447 = scalar_lea.vmem [#allocation7], %s446
        %s448 = sand.u32 %s147, 1
        %s449 = sand.u32 %s147, 1
        %s450 = smul.addr %s449, 32
        %s451 = scalar_lea.vmem [#allocation8], %s450
        // Predicated region
        $region37: #{tpu_custom_call.1} parent=27 // pred_check
          %p452 = pneg %p101
        $region38: #{tpu_custom_call.1} parent=27 // pred_check_branch
          %454 = sbr.rel (%p452) target = $region40
        $region39: #{tpu_custom_call.1} parent=27 // pred_region
          %s455 = smul.addr %s24, 16
          %s456 = sadd.s32 %s25, %s455
          %s457 = smul.addr %s456, 4
          %s458 = scalar_lea.vmem %s2, %s457
          // Predicated region
          $region41: #{tpu_custom_call.1} parent=39 // pred_check
            _
          $region42: #{tpu_custom_call.1} parent=39 // pred_check_branch
            %460 = sbr.rel (0) target = $region44
          $region43: #{tpu_custom_call.1} parent=39 // pred_region
            // Predicated region
            $region45: #{tpu_custom_call.1} parent=43 // pred_check
              _
            $region46: #{tpu_custom_call.1} parent=43 // pred_check_branch
              %462 = sbr.rel target = $region48
            $region47: #{tpu_custom_call.1} parent=43 // pred_region
              // Predicated region
              $region60: #{tpu_custom_call.1} parent=47 // pred_check
                _
              $region61: #{tpu_custom_call.1} parent=47 // pred_check_branch
                %491 = sbr.rel (0) target = $region63
              $region62: #{tpu_custom_call.1} parent=47 // pred_region
                loop: start=0, step=1, limit=1
                $region64: #{tpu_custom_call.1} parent=62 // loop_pre_header
                  _
                $region65: #{tpu_custom_call.1} parent=62 // loop_header
                  %s493 = sphi 0, %s497
                  %p494 = scmp.ge.s32.totalorder %s493, 1
                  %s498 = sphi %s443, %s443
                  %s499 = sphi %s458, %s458
                $region66: #{tpu_custom_call.1} parent=62 // loop_header_branch
                  %496 = sbr.rel (%p494) target = $region70
                $region67: #{tpu_custom_call.1} parent=62 // loop_body
                  _
                $region68: #{tpu_custom_call.1} parent=62 // loop_footer
                  %s497 = sadd.s32 1, %s493
                $region69: #{tpu_custom_call.1} parent=62 // loop_footer_branch
                  %492 = sbr.rel target = $region65
                $region70: #{tpu_custom_call.1} parent=62 // loop_exit
                  _
                loop: start=0, step=1, limit=1
                $region71: #{tpu_custom_call.1} parent=62 // loop_pre_header
                  _
                $region72: #{tpu_custom_call.1} parent=62 // loop_header
                  %s502 = sphi 0, %s506
                  %p503 = scmp.ge.s32.totalorder %s502, 1
                  %s507 = sphi %s443, %s443
                  %s508 = sphi %s458, %s458
                $region73: #{tpu_custom_call.1} parent=62 // loop_header_branch
                  %505 = sbr.rel (%p503) target = $region77
                $region74: #{tpu_custom_call.1} parent=62 // loop_body
                  %v509 = vld [vmem:[%s507] sm:$0xf]
                  %510 = vst [vmem:[%s508] sm:$0xf] %v509
                  %v511 = vld [vmem:[%s507 + $0x4] sm:$0xf]
                  %512 = vst [vmem:[%s508 + $0x8] sm:$0xf] %v511
                  %v513 = vld [vmem:[%s507 + $0x8] sm:$0xf]
                  %514 = vst [vmem:[%s508 + $0x10] sm:$0xf] %v513
                  %v515 = vld [vmem:[%s507 + $0xc] sm:$0xf]
                  %516 = vst [vmem:[%s508 + $0x18] sm:$0xf] %v515
                  %v517 = vld [vmem:[%s507 + $0x10] sm:$0xf]
                  %518 = vst [vmem:[%s508 + $0x20] sm:$0xf] %v517
                  %v519 = vld [vmem:[%s507 + $0x14] sm:$0xf]
                  %520 = vst [vmem:[%s508 + $0x28] sm:$0xf] %v519
                  %v521 = vld [vmem:[%s507 + $0x18] sm:$0xf]
                  %522 = vst [vmem:[%s508 + $0x30] sm:$0xf] %v521
                  %v523 = vld [vmem:[%s507 + $0x1c] sm:$0xf]
                  %524 = vst [vmem:[%s508 + $0x38] sm:$0xf] %v523
                $region75: #{tpu_custom_call.1} parent=62 // loop_footer
                  %s506 = sadd.s32 1, %s502
                $region76: #{tpu_custom_call.1} parent=62 // loop_footer_branch
                  %501 = sbr.rel target = $region72
                $region77: #{tpu_custom_call.1} parent=62 // loop_exit
                  _
              $region63: #{tpu_custom_call.1} parent=47 // pred_fallthru
                _
            $region48: #{tpu_custom_call.1} parent=43 // pred_fallthru
              _
            // Predicated region
            $region49: #{tpu_custom_call.1} parent=43 // pred_check
              _
            $region50: #{tpu_custom_call.1} parent=43 // pred_check_branch
              %464 = sbr.rel (0) target = $region52
            $region51: #{tpu_custom_call.1} parent=43 // pred_region
              loop: start=0, step=1, limit=1
              $region53: #{tpu_custom_call.1} parent=51 // loop_pre_header
                _
              $region54: #{tpu_custom_call.1} parent=51 // loop_header
                %s467 = sphi 0, %s471
                %p468 = scmp.ge.s32.totalorder %s467, 1
                %s472 = sphi %s443, %s443
                %s473 = sphi %s458, %s458
              $region55: #{tpu_custom_call.1} parent=51 // loop_header_branch
                %470 = sbr.rel (%p468) target = $region59
              $region56: #{tpu_custom_call.1} parent=51 // loop_body
                %v474 = vld [vmem:[%s472] sm:$0xf]
                %475 = vst [vmem:[%s473] sm:$0xf] %v474
                %v476 = vld [vmem:[%s472 + $0x4] sm:$0xf]
                %477 = vst [vmem:[%s473 + $0x8] sm:$0xf] %v476
                %v478 = vld [vmem:[%s472 + $0x8] sm:$0xf]
                %479 = vst [vmem:[%s473 + $0x10] sm:$0xf] %v478
                %v480 = vld [vmem:[%s472 + $0xc] sm:$0xf]
                %481 = vst [vmem:[%s473 + $0x18] sm:$0xf] %v480
                %v482 = vld [vmem:[%s472 + $0x10] sm:$0xf]
                %483 = vst [vmem:[%s473 + $0x20] sm:$0xf] %v482
                %v484 = vld [vmem:[%s472 + $0x14] sm:$0xf]
                %485 = vst [vmem:[%s473 + $0x28] sm:$0xf] %v484
                %v486 = vld [vmem:[%s472 + $0x18] sm:$0xf]
                %487 = vst [vmem:[%s473 + $0x30] sm:$0xf] %v486
                %v488 = vld [vmem:[%s472 + $0x1c] sm:$0xf]
                %489 = vst [vmem:[%s473 + $0x38] sm:$0xf] %v488
              $region57: #{tpu_custom_call.1} parent=51 // loop_footer
                %s471 = sadd.s32 1, %s467
              $region58: #{tpu_custom_call.1} parent=51 // loop_footer_branch
                %466 = sbr.rel target = $region54
              $region59: #{tpu_custom_call.1} parent=51 // loop_exit
                _
            $region52: #{tpu_custom_call.1} parent=43 // pred_fallthru
              _
          $region44: #{tpu_custom_call.1} parent=39 // pred_fallthru
            _
          %525 = vnop
        $region40: #{tpu_custom_call.1} parent=27 // pred_fallthru
          _
        // Predicated region
        $region78: #{tpu_custom_call.1} parent=27 // pred_check
          %p526 = pneg %p129
        $region79: #{tpu_custom_call.1} parent=27 // pred_check_branch
          %528 = sbr.rel (%p526) target = $region81
        $region80: #{tpu_custom_call.1} parent=27 // pred_region
          %s529 = smul.addr %s24, 16
          %s530 = sadd.s32 %s25, %s529
          %s531 = smul.addr %s530, 4
          %s532 = scalar_lea.vmem %s3, %s531
          // Predicated region
          $region82: #{tpu_custom_call.1} parent=80 // pred_check
            _
          $region83: #{tpu_custom_call.1} parent=80 // pred_check_branch
            %534 = sbr.rel (0) target = $region85
          $region84: #{tpu_custom_call.1} parent=80 // pred_region
            // Predicated region
            $region86: #{tpu_custom_call.1} parent=84 // pred_check
              _
            $region87: #{tpu_custom_call.1} parent=84 // pred_check_branch
              %536 = sbr.rel target = $region89
            $region88: #{tpu_custom_call.1} parent=84 // pred_region
              // Predicated region
              $region101: #{tpu_custom_call.1} parent=88 // pred_check
                _
              $region102: #{tpu_custom_call.1} parent=88 // pred_check_branch
                %565 = sbr.rel (0) target = $region104
              $region103: #{tpu_custom_call.1} parent=88 // pred_region
                loop: start=0, step=1, limit=1
                $region105: #{tpu_custom_call.1} parent=103 // loop_pre_header
                  _
                $region106: #{tpu_custom_call.1} parent=103 // loop_header
                  %s567 = sphi 0, %s571
                  %p568 = scmp.ge.s32.totalorder %s567, 1
                  %s572 = sphi %s447, %s447
                  %s573 = sphi %s532, %s532
                $region107: #{tpu_custom_call.1} parent=103 // loop_header_branch
                  %570 = sbr.rel (%p568) target = $region111
                $region108: #{tpu_custom_call.1} parent=103 // loop_body
                  _
                $region109: #{tpu_custom_call.1} parent=103 // loop_footer
                  %s571 = sadd.s32 1, %s567
                $region110: #{tpu_custom_call.1} parent=103 // loop_footer_branch
                  %566 = sbr.rel target = $region106
                $region111: #{tpu_custom_call.1} parent=103 // loop_exit
                  _
                loop: start=0, step=1, limit=1
                $region112: #{tpu_custom_call.1} parent=103 // loop_pre_header
                  _
                $region113: #{tpu_custom_call.1} parent=103 // loop_header
                  %s576 = sphi 0, %s580
                  %p577 = scmp.ge.s32.totalorder %s576, 1
                  %s581 = sphi %s447, %s447
                  %s582 = sphi %s532, %s532
                $region114: #{tpu_custom_call.1} parent=103 // loop_header_branch
                  %579 = sbr.rel (%p577) target = $region118
                $region115: #{tpu_custom_call.1} parent=103 // loop_body
                  %v583 = vld [vmem:[%s581] sm:$0xf]
                  %584 = vst [vmem:[%s582] sm:$0xf] %v583
                  %v585 = vld [vmem:[%s581 + $0x4] sm:$0xf]
                  %586 = vst [vmem:[%s582 + $0x8] sm:$0xf] %v585
                  %v587 = vld [vmem:[%s581 + $0x8] sm:$0xf]
                  %588 = vst [vmem:[%s582 + $0x10] sm:$0xf] %v587
                  %v589 = vld [vmem:[%s581 + $0xc] sm:$0xf]
                  %590 = vst [vmem:[%s582 + $0x18] sm:$0xf] %v589
                  %v591 = vld [vmem:[%s581 + $0x10] sm:$0xf]
                  %592 = vst [vmem:[%s582 + $0x20] sm:$0xf] %v591
                  %v593 = vld [vmem:[%s581 + $0x14] sm:$0xf]
                  %594 = vst [vmem:[%s582 + $0x28] sm:$0xf] %v593
                  %v595 = vld [vmem:[%s581 + $0x18] sm:$0xf]
                  %596 = vst [vmem:[%s582 + $0x30] sm:$0xf] %v595
                  %v597 = vld [vmem:[%s581 + $0x1c] sm:$0xf]
                  %598 = vst [vmem:[%s582 + $0x38] sm:$0xf] %v597
                $region116: #{tpu_custom_call.1} parent=103 // loop_footer
                  %s580 = sadd.s32 1, %s576
                $region117: #{tpu_custom_call.1} parent=103 // loop_footer_branch
                  %575 = sbr.rel target = $region113
                $region118: #{tpu_custom_call.1} parent=103 // loop_exit
                  _
              $region104: #{tpu_custom_call.1} parent=88 // pred_fallthru
                _
            $region89: #{tpu_custom_call.1} parent=84 // pred_fallthru
              _
            // Predicated region
            $region90: #{tpu_custom_call.1} parent=84 // pred_check
              _
            $region91: #{tpu_custom_call.1} parent=84 // pred_check_branch
              %538 = sbr.rel (0) target = $region93
            $region92: #{tpu_custom_call.1} parent=84 // pred_region
              loop: start=0, step=1, limit=1
              $region94: #{tpu_custom_call.1} parent=92 // loop_pre_header
                _
              $region95: #{tpu_custom_call.1} parent=92 // loop_header
                %s541 = sphi 0, %s545
                %p542 = scmp.ge.s32.totalorder %s541, 1
                %s546 = sphi %s447, %s447
                %s547 = sphi %s532, %s532
              $region96: #{tpu_custom_call.1} parent=92 // loop_header_branch
                %544 = sbr.rel (%p542) target = $region100
              $region97: #{tpu_custom_call.1} parent=92 // loop_body
                %v548 = vld [vmem:[%s546] sm:$0xf]
                %549 = vst [vmem:[%s547] sm:$0xf] %v548
                %v550 = vld [vmem:[%s546 + $0x4] sm:$0xf]
                %551 = vst [vmem:[%s547 + $0x8] sm:$0xf] %v550
                %v552 = vld [vmem:[%s546 + $0x8] sm:$0xf]
                %553 = vst [vmem:[%s547 + $0x10] sm:$0xf] %v552
                %v554 = vld [vmem:[%s546 + $0xc] sm:$0xf]
                %555 = vst [vmem:[%s547 + $0x18] sm:$0xf] %v554
                %v556 = vld [vmem:[%s546 + $0x10] sm:$0xf]
                %557 = vst [vmem:[%s547 + $0x20] sm:$0xf] %v556
                %v558 = vld [vmem:[%s546 + $0x14] sm:$0xf]
                %559 = vst [vmem:[%s547 + $0x28] sm:$0xf] %v558
                %v560 = vld [vmem:[%s546 + $0x18] sm:$0xf]
                %561 = vst [vmem:[%s547 + $0x30] sm:$0xf] %v560
                %v562 = vld [vmem:[%s546 + $0x1c] sm:$0xf]
                %563 = vst [vmem:[%s547 + $0x38] sm:$0xf] %v562
              $region98: #{tpu_custom_call.1} parent=92 // loop_footer
                %s545 = sadd.s32 1, %s541
              $region99: #{tpu_custom_call.1} parent=92 // loop_footer_branch
                %540 = sbr.rel target = $region95
              $region100: #{tpu_custom_call.1} parent=92 // loop_exit
                _
            $region93: #{tpu_custom_call.1} parent=84 // pred_fallthru
              _
          $region85: #{tpu_custom_call.1} parent=80 // pred_fallthru
            _
          %599 = vnop
        $region81: #{tpu_custom_call.1} parent=27 // pred_fallthru
          _
        // Predicated region
        $region119: #{tpu_custom_call.1} parent=27 // pred_check
          %p600 = pneg %p157
        $region120: #{tpu_custom_call.1} parent=27 // pred_check_branch
          %602 = sbr.rel (%p600) target = $region122
        $region121: #{tpu_custom_call.1} parent=27 // pred_region
          %s603 = smul.addr %s24, 16
          %s604 = sadd.s32 %s25, %s603
          %s605 = smul.addr %s604, 4
          %s606 = scalar_lea.vmem %s4, %s605
          // Predicated region
          $region123: #{tpu_custom_call.1} parent=121 // pred_check
            _
          $region124: #{tpu_custom_call.1} parent=121 // pred_check_branch
            %608 = sbr.rel (0) target = $region126
          $region125: #{tpu_custom_call.1} parent=121 // pred_region
            // Predicated region
            $region127: #{tpu_custom_call.1} parent=125 // pred_check
              _
            $region128: #{tpu_custom_call.1} parent=125 // pred_check_branch
              %610 = sbr.rel target = $region130
            $region129: #{tpu_custom_call.1} parent=125 // pred_region
              // Predicated region
              $region142: #{tpu_custom_call.1} parent=129 // pred_check
                _
              $region143: #{tpu_custom_call.1} parent=129 // pred_check_branch
                %639 = sbr.rel (0) target = $region145
              $region144: #{tpu_custom_call.1} parent=129 // pred_region
                loop: start=0, step=1, limit=1
                $region146: #{tpu_custom_call.1} parent=144 // loop_pre_header
                  _
                $region147: #{tpu_custom_call.1} parent=144 // loop_header
                  %s641 = sphi 0, %s645
                  %p642 = scmp.ge.s32.totalorder %s641, 1
                  %s646 = sphi %s451, %s451
                  %s647 = sphi %s606, %s606
                $region148: #{tpu_custom_call.1} parent=144 // loop_header_branch
                  %644 = sbr.rel (%p642) target = $region152
                $region149: #{tpu_custom_call.1} parent=144 // loop_body
                  _
                $region150: #{tpu_custom_call.1} parent=144 // loop_footer
                  %s645 = sadd.s32 1, %s641
                $region151: #{tpu_custom_call.1} parent=144 // loop_footer_branch
                  %640 = sbr.rel target = $region147
                $region152: #{tpu_custom_call.1} parent=144 // loop_exit
                  _
                loop: start=0, step=1, limit=1
                $region153: #{tpu_custom_call.1} parent=144 // loop_pre_header
                  _
                $region154: #{tpu_custom_call.1} parent=144 // loop_header
                  %s650 = sphi 0, %s654
                  %p651 = scmp.ge.s32.totalorder %s650, 1
                  %s655 = sphi %s451, %s451
                  %s656 = sphi %s606, %s606
                $region155: #{tpu_custom_call.1} parent=144 // loop_header_branch
                  %653 = sbr.rel (%p651) target = $region159
                $region156: #{tpu_custom_call.1} parent=144 // loop_body
                  %v657 = vld [vmem:[%s655] sm:$0xf]
                  %658 = vst [vmem:[%s656] sm:$0xf] %v657
                  %v659 = vld [vmem:[%s655 + $0x4] sm:$0xf]
                  %660 = vst [vmem:[%s656 + $0x8] sm:$0xf] %v659
                  %v661 = vld [vmem:[%s655 + $0x8] sm:$0xf]
                  %662 = vst [vmem:[%s656 + $0x10] sm:$0xf] %v661
                  %v663 = vld [vmem:[%s655 + $0xc] sm:$0xf]
                  %664 = vst [vmem:[%s656 + $0x18] sm:$0xf] %v663
                  %v665 = vld [vmem:[%s655 + $0x10] sm:$0xf]
                  %666 = vst [vmem:[%s656 + $0x20] sm:$0xf] %v665
                  %v667 = vld [vmem:[%s655 + $0x14] sm:$0xf]
                  %668 = vst [vmem:[%s656 + $0x28] sm:$0xf] %v667
                  %v669 = vld [vmem:[%s655 + $0x18] sm:$0xf]
                  %670 = vst [vmem:[%s656 + $0x30] sm:$0xf] %v669
                  %v671 = vld [vmem:[%s655 + $0x1c] sm:$0xf]
                  %672 = vst [vmem:[%s656 + $0x38] sm:$0xf] %v671
                $region157: #{tpu_custom_call.1} parent=144 // loop_footer
                  %s654 = sadd.s32 1, %s650
                $region158: #{tpu_custom_call.1} parent=144 // loop_footer_branch
                  %649 = sbr.rel target = $region154
                $region159: #{tpu_custom_call.1} parent=144 // loop_exit
                  _
              $region145: #{tpu_custom_call.1} parent=129 // pred_fallthru
                _
            $region130: #{tpu_custom_call.1} parent=125 // pred_fallthru
              _
            // Predicated region
            $region131: #{tpu_custom_call.1} parent=125 // pred_check
              _
            $region132: #{tpu_custom_call.1} parent=125 // pred_check_branch
              %612 = sbr.rel (0) target = $region134
            $region133: #{tpu_custom_call.1} parent=125 // pred_region
              loop: start=0, step=1, limit=1
              $region135: #{tpu_custom_call.1} parent=133 // loop_pre_header
                _
              $region136: #{tpu_custom_call.1} parent=133 // loop_header
                %s615 = sphi 0, %s619
                %p616 = scmp.ge.s32.totalorder %s615, 1
                %s620 = sphi %s451, %s451
                %s621 = sphi %s606, %s606
              $region137: #{tpu_custom_call.1} parent=133 // loop_header_branch
                %618 = sbr.rel (%p616) target = $region141
              $region138: #{tpu_custom_call.1} parent=133 // loop_body
                %v622 = vld [vmem:[%s620] sm:$0xf]
                %623 = vst [vmem:[%s621] sm:$0xf] %v622
                %v624 = vld [vmem:[%s620 + $0x4] sm:$0xf]
                %625 = vst [vmem:[%s621 + $0x8] sm:$0xf] %v624
                %v626 = vld [vmem:[%s620 + $0x8] sm:$0xf]
                %627 = vst [vmem:[%s621 + $0x10] sm:$0xf] %v626
                %v628 = vld [vmem:[%s620 + $0xc] sm:$0xf]
                %629 = vst [vmem:[%s621 + $0x18] sm:$0xf] %v628
                %v630 = vld [vmem:[%s620 + $0x10] sm:$0xf]
                %631 = vst [vmem:[%s621 + $0x20] sm:$0xf] %v630
                %v632 = vld [vmem:[%s620 + $0x14] sm:$0xf]
                %633 = vst [vmem:[%s621 + $0x28] sm:$0xf] %v632
                %v634 = vld [vmem:[%s620 + $0x18] sm:$0xf]
                %635 = vst [vmem:[%s621 + $0x30] sm:$0xf] %v634
                %v636 = vld [vmem:[%s620 + $0x1c] sm:$0xf]
                %637 = vst [vmem:[%s621 + $0x38] sm:$0xf] %v636
              $region139: #{tpu_custom_call.1} parent=133 // loop_footer
                %s619 = sadd.s32 1, %s615
              $region140: #{tpu_custom_call.1} parent=133 // loop_footer_branch
                %614 = sbr.rel target = $region136
              $region141: #{tpu_custom_call.1} parent=133 // loop_exit
                _
            $region134: #{tpu_custom_call.1} parent=125 // pred_fallthru
              _
          $region126: #{tpu_custom_call.1} parent=121 // pred_fallthru
            _
          %673 = vnop
        $region122: #{tpu_custom_call.1} parent=27 // pred_fallthru
          _
      $region28: #{tpu_custom_call.1} parent=5 // pred_fallthru
        _
      %p674 = scmp.le.s32.totalorder 2, %s15
      // Predicated region
      $region160: #{tpu_custom_call.1} parent=5 // pred_check
        %p675 = pneg %p674
      $region161: #{tpu_custom_call.1} parent=5 // pred_check_branch
        %677 = sbr.rel (%p675) target = $region163
      $region162: #{tpu_custom_call.1} parent=5 // pred_region
        %s678 = ssub.s32 %s15, 2
        // Predicated region
        $region164: #{tpu_custom_call.1} parent=162 // pred_check
          %p679 = pneg %p107
        $region165: #{tpu_custom_call.1} parent=162 // pred_check_branch
          %681 = sbr.rel (%p679) target = $region167
        $region166: #{tpu_custom_call.1} parent=162 // pred_region
          %s682 = sand.u32 %s92, 1
          %s683 = sand.u32 %s92, 1
          %s684 = smul.addr %s683, 32
          %s685 = scalar_lea.vmem [#allocation6], %s684
        $region167: #{tpu_custom_call.1} parent=162 // pred_fallthru
          _
        // Predicated region
        $region168: #{tpu_custom_call.1} parent=162 // pred_check
          %p686 = pneg %p135
        $region169: #{tpu_custom_call.1} parent=162 // pred_check_branch
          %688 = sbr.rel (%p686) target = $region171
        $region170: #{tpu_custom_call.1} parent=162 // pred_region
          %s689 = sand.u32 %s120, 1
          %s690 = sand.u32 %s120, 1
          %s691 = smul.addr %s690, 32
          %s692 = scalar_lea.vmem [#allocation7], %s691
        $region171: #{tpu_custom_call.1} parent=162 // pred_fallthru
          _
        // Predicated region
        $region172: #{tpu_custom_call.1} parent=162 // pred_check
          %p693 = pneg %p163
        $region173: #{tpu_custom_call.1} parent=162 // pred_check_branch
          %695 = sbr.rel (%p693) target = $region175
        $region174: #{tpu_custom_call.1} parent=162 // pred_region
          %s696 = sand.u32 %s148, 1
          %s697 = sand.u32 %s148, 1
          %s698 = smul.addr %s697, 32
          %s699 = scalar_lea.vmem [#allocation8], %s698
        $region175: #{tpu_custom_call.1} parent=162 // pred_fallthru
          _
      $region163: #{tpu_custom_call.1} parent=5 // pred_fallthru
        _
    $region6: #{tpu_custom_call.1} parent=1 // loop_footer
      %s19 = sadd.s32 1, %s15
    $region7: #{tpu_custom_call.1} parent=1 // loop_footer_branch
      %14 = sbr.rel target = $region3
    $region8: #{tpu_custom_call.1} parent=1 // loop_exit
      _
    %700 = vsyncpa [#allocation3], 1
    %s701 = scalar_lea.sflag [#allocation3], 1
    %702 = vsyncpa %s701, 1
    %703 = vsyncpa [#allocation5], 1

</llo_original>
